<compile_context>
chip_gen: v5e
topology: v5e:2x2
jax: 0.10.0
libtpu: 0.0.40
codegen_flags: <defaults>
</compile_context>

<pallas_src>
import functools

import numpy as np
import jax
import jax.numpy as jnp
from jax.experimental import pallas as pl
from jax.experimental.pallas import tpu as pltpu


# ------------------------------ Pallas kernel -------------------------------

def _wave_block_kernel(x_ref, xp_ref, w23_ref, b23_ref, w4_ref, b4_ref, o_ref,
                       *, kernel_size, dilation, C, L, BB):
    # x_ref  : (BB, C, L)        f32  unpadded input (residual path)
    # xp_ref : (BB, C, L+2*pad)  bf16 zero-padded input (conv path)
    # w23_ref: (2C, K*C)         bf16 conv2/conv3 weights, im2col layout
    # b23_ref: (2C, 1)           f32  conv2/conv3 biases stacked
    # w4_ref : (C, C)            bf16 1x1 conv weight
    # b4_ref : (C, 1)            f32  1x1 conv bias
    # o_ref  : (BB, C, L)        f32  output block

    # Build the lane-dense im2col slab (K*C, BB*L):
    #   rows  t*C + c_in  hold the tap-t shifted window of channel c_in,
    #   cols  b*L + i     hold time step i of batch element b.
    taps = []
    for t in range(kernel_size):                         # static unroll over taps
        off = t * dilation
        cols = [xp_ref[b, :, off:off + L] for b in range(BB)]   # (C, L) bf16 each
        taps.append(cols[0] if BB == 1 else jnp.concatenate(cols, axis=-1))
    im = jnp.concatenate(taps, axis=0)                   # (K*C, BB*L) bf16

    # conv2 & conv3 fused: a single MXU matmul with contraction depth K*C,
    # f32 accumulation, then one bias add.
    acc = jnp.dot(w23_ref[...], im,
                  preferred_element_type=jnp.float32) + b23_ref[...]   # (2C, BB*L)

    # Gated activation (tanh / sigmoid run on the EUP slot).
    gated = jnp.tanh(acc[:C]) * jax.nn.sigmoid(acc[C:])                # (C, BB*L)

    # 1x1 conv (second MXU matmul) + bias.
    y = jnp.dot(w4_ref[...], gated.astype(jnp.bfloat16),
                preferred_element_type=jnp.float32) + b4_ref[...]      # (C, BB*L)

    # Residual add + store, per batch element (aligned 128-lane chunks).
    for b in range(BB):
        o_ref[b] = x_ref[b] + y[:, b * L:(b + 1) * L]


# --------------------------------- Wrapper ----------------------------------

def wave_block_forward(x, params, *, kernel_size, dilation, batch_block=None):
    """Fused wave_block forward.  x: (B, C, L) float32 with C == out_ch."""
    B, C, L = x.shape
    K = kernel_size
    pad = (K + (K - 1) * (dilation - 1)) // 2
    eff = (K - 1) * dilation + 1
    # The residual add requires the conv output length to equal L (true for odd K,
    # exactly as in the PyTorch module).
    assert L + 2 * pad - eff + 1 == L, "wave_block residual needs same-length conv"

    # Batch elements per grid step.  Default: the whole batch in one block.
    # For large B, pick batch_block so each TensorCore gets >= 2 grid steps.
    BB = B if batch_block is None else batch_block
    assert B % BB == 0, "batch must be divisible by batch_block"
    nb = B // BB
    Lp = L + 2 * pad

    # One-time prep (outside the kernel):
    #   * zero-pad the time axis and cast the conv-path input to bf16,
    #   * pack conv2/conv3 into a single im2col weight (2C, K*C) in bf16,
    #   * reshape biases to column vectors.
    xp = jnp.pad(x, ((0, 0), (0, 0), (pad, pad))).astype(jnp.bfloat16)
    wcat = jnp.concatenate([params["w2"], params["w3"]], axis=0)        # (2C, C, K)
    w23 = jnp.transpose(wcat, (0, 2, 1)).reshape(2 * C, K * C).astype(jnp.bfloat16)
    b23 = jnp.concatenate([params["b2"], params["b3"]], axis=0
                          ).reshape(2 * C, 1).astype(jnp.float32)
    w4 = params["w4"][:, :, 0].astype(jnp.bfloat16)                     # (C, C)
    b4 = params["b4"].reshape(C, 1).astype(jnp.float32)

    kernel = functools.partial(_wave_block_kernel, kernel_size=K,
                               dilation=dilation, C=C, L=L, BB=BB)
    return pl.pallas_call(
        kernel,
        out_shape=jax.ShapeDtypeStruct((B, C, L), jnp.float32),
        grid=(nb,),
        in_specs=[
            pl.BlockSpec((BB, C, L), lambda i: (i, 0, 0)),       # x (residual)
            pl.BlockSpec((BB, C, Lp), lambda i: (i, 0, 0)),      # padded x (conv)
            pl.BlockSpec((2 * C, K * C), lambda i: (0, 0)),      # fused conv2/3 W
            pl.BlockSpec((2 * C, 1), lambda i: (0, 0)),          # fused conv2/3 b
            pl.BlockSpec((C, C), lambda i: (0, 0)),              # 1x1 conv W
            pl.BlockSpec((C, 1), lambda i: (0, 0)),              # 1x1 conv b
        ],
        out_specs=pl.BlockSpec((BB, C, L), lambda i: (i, 0, 0)),
        compiler_params=pltpu.CompilerParams(
            dimension_semantics=("parallel",)),   # batch blocks shard across TCs
    )(x, xp, w23, b23, w4, b4)


# ------------------------- Pure-JAX reference (check) ------------------------

def _ref_wave_block(x, params, *, kernel_size, dilation):
    pad = (kernel_size + (kernel_size - 1) * (dilation - 1)) // 2
    dn = jax.lax.conv_dimension_numbers(x.shape, params["w2"].shape,
                                        ("NCH", "OIH", "NCH"))

    def conv(inp, w, b, d, p):
        out = jax.lax.conv_general_dilated(
            inp, w, window_strides=(1,), padding=[(p, p)], rhs_dilation=(d,),
            dimension_numbers=dn, precision=jax.lax.Precision.HIGHEST)
        return out + b[None, :, None]

    t = jnp.tanh(conv(x, params["w2"], params["b2"], dilation, pad))
    s = jax.nn.sigmoid(conv(x, params["w3"], params["b3"], dilation, pad))
    y = conv(t * s, params["w4"], params["b4"], 1, 0)
    return x + y


# ----------------------------------- Main ------------------------------------

if __name__ == "__main__":
    # wave_block(in_ch=16, out_ch=16, kernel_size=3, dilation=2); x: (B, out_ch, L)
    B, C, L = 2, 16, 128
    K, DIL = 3, 2

    key = jax.random.PRNGKey(0)
    kx, k2, kb2, k3, kb3, k4, kb4 = jax.random.split(key, 7)
    x = jax.random.normal(kx, (B, C, L), dtype=jnp.float32)
    params = {
        "w2": 0.1 * jax.random.normal(k2, (C, C, K), dtype=jnp.float32),
        "b2": 0.1 * jax.random.normal(kb2, (C,), dtype=jnp.float32),
        "w3": 0.1 * jax.random.normal(k3, (C, C, K), dtype=jnp.float32),
        "b3": 0.1 * jax.random.normal(kb3, (C,), dtype=jnp.float32),
        "w4": 0.1 * jax.random.normal(k4, (C, C, 1), dtype=jnp.float32),
        "b4": 0.1 * jax.random.normal(kb4, (C,), dtype=jnp.float32),
    }

    fwd = jax.jit(functools.partial(wave_block_forward,
                                    kernel_size=K, dilation=DIL))
    y = fwd(x, params)
    jax.block_until_ready(y)
    assert y.shape == (B, C, L)

    # Reference is full-f32 (Precision.HIGHEST); the kernel uses bf16 MXU
    # operands with f32 accumulation, so compare with a bf16-appropriate
    # tolerance (observed error is a few e-3 at these shapes).
    y_ref = _ref_wave_block(x, params, kernel_size=K, dilation=DIL)
    np.testing.assert_allclose(np.asarray(y), np.asarray(y_ref),
                               atol=2e-2, rtol=2e-2)
    print("KERNEL_OK")
</pallas_src>

<mosaic_0001>
module attributes {stable_mosaic.version = 11 : i64} {
  func.func @_wave_block_kernel(%arg0: i32, %arg1: memref<2x16x128xf32, #tpu.memory_space<vmem>>, %arg2: memref<2x16x132xbf16, #tpu.memory_space<vmem>>, %arg3: memref<32x48xbf16, #tpu.memory_space<vmem>>, %arg4: memref<32x1xf32, #tpu.memory_space<vmem>>, %arg5: memref<16x16xbf16, #tpu.memory_space<vmem>>, %arg6: memref<16x1xf32, #tpu.memory_space<vmem>>, %arg7: memref<2x16x128xf32, #tpu.memory_space<vmem>>) attributes {dimension_semantics = [#tpu.dimension_semantics<parallel>], iteration_bounds = array<i64: 1>, scalar_prefetch = 0 : i64, scratch_operands = 0 : i64, tpu.core_type = #tpu.core_type<tc>, window_params = [{transform_indices = @transform_0, window_bounds = array<i64: 2, 16, 128>}, {transform_indices = @transform_1, window_bounds = array<i64: 2, 16, 132>}, {pipeline_mode = #tpu.pipeline_mode<synchronous>, transform_indices = @transform_2, window_bounds = array<i64: 32, 48>}, {pipeline_mode = #tpu.pipeline_mode<synchronous>, transform_indices = @transform_3, window_bounds = array<i64: 32, 1>}, {pipeline_mode = #tpu.pipeline_mode<synchronous>, transform_indices = @transform_4, window_bounds = array<i64: 16, 16>}, {pipeline_mode = #tpu.pipeline_mode<synchronous>, transform_indices = @transform_5, window_bounds = array<i64: 16, 1>}, {transform_indices = @transform_6, window_bounds = array<i64: 2, 16, 128>}]} {
    %c0 = arith.constant 0 : index
    %c0_0 = arith.constant 0 : index
    %c0_1 = arith.constant 0 : index
    %0 = vector.load %arg2[%c0, %c0_0, %c0_1] : memref<2x16x132xbf16, #tpu.memory_space<vmem>>, vector<1x16x128xbf16>
    %1 = vector.shape_cast %0 : vector<1x16x128xbf16> to vector<16x128xbf16>
    %c1 = arith.constant 1 : index
    %c0_2 = arith.constant 0 : index
    %c0_3 = arith.constant 0 : index
    %2 = vector.load %arg2[%c1, %c0_2, %c0_3] : memref<2x16x132xbf16, #tpu.memory_space<vmem>>, vector<1x16x128xbf16>
    %3 = vector.shape_cast %2 : vector<1x16x128xbf16> to vector<16x128xbf16>
    %4 = tpu.concatenate %1, %3 in 1 : vector<16x128xbf16>, vector<16x128xbf16> -> vector<16x256xbf16>
    %c0_4 = arith.constant 0 : index
    %c0_5 = arith.constant 0 : index
    %c2 = arith.constant 2 : index
    %5 = vector.load %arg2[%c0_4, %c0_5, %c2] : memref<2x16x132xbf16, #tpu.memory_space<vmem>>, vector<1x16x128xbf16>
    %6 = vector.shape_cast %5 : vector<1x16x128xbf16> to vector<16x128xbf16>
    %c1_6 = arith.constant 1 : index
    %c0_7 = arith.constant 0 : index
    %c2_8 = arith.constant 2 : index
    %7 = vector.load %arg2[%c1_6, %c0_7, %c2_8] : memref<2x16x132xbf16, #tpu.memory_space<vmem>>, vector<1x16x128xbf16>
    %8 = vector.shape_cast %7 : vector<1x16x128xbf16> to vector<16x128xbf16>
    %9 = tpu.concatenate %6, %8 in 1 : vector<16x128xbf16>, vector<16x128xbf16> -> vector<16x256xbf16>
    %c0_9 = arith.constant 0 : index
    %c0_10 = arith.constant 0 : index
    %c4 = arith.constant 4 : index
    %10 = vector.load %arg2[%c0_9, %c0_10, %c4] : memref<2x16x132xbf16, #tpu.memory_space<vmem>>, vector<1x16x128xbf16>
    %11 = vector.shape_cast %10 : vector<1x16x128xbf16> to vector<16x128xbf16>
    %c1_11 = arith.constant 1 : index
    %c0_12 = arith.constant 0 : index
    %c4_13 = arith.constant 4 : index
    %12 = vector.load %arg2[%c1_11, %c0_12, %c4_13] : memref<2x16x132xbf16, #tpu.memory_space<vmem>>, vector<1x16x128xbf16>
    %13 = vector.shape_cast %12 : vector<1x16x128xbf16> to vector<16x128xbf16>
    %14 = tpu.concatenate %11, %13 in 1 : vector<16x128xbf16>, vector<16x128xbf16> -> vector<16x256xbf16>
    %15 = tpu.concatenate %4, %9, %14 in 0 : vector<16x256xbf16>, vector<16x256xbf16>, vector<16x256xbf16> -> vector<48x256xbf16>
    %c0_14 = arith.constant 0 : index
    %c0_15 = arith.constant 0 : index
    %16 = vector.load %arg3[%c0_14, %c0_15] : memref<32x48xbf16, #tpu.memory_space<vmem>>, vector<32x48xbf16>
    %cst = arith.constant dense<0.000000e+00> : vector<32x256xf32>
    %17 = tpu.matmul %16, %15, %cst {dimension_numbers = #tpu.dot_dimension_numbers<[1], [0], [0], [1], [0, 0, 1, 1], [], []>} : vector<32x48xbf16>, vector<48x256xbf16>, vector<32x256xf32> -> vector<32x256xf32>
    %c0_16 = arith.constant 0 : index
    %c0_17 = arith.constant 0 : index
    %18 = vector.load %arg4[%c0_16, %c0_17] : memref<32x1xf32, #tpu.memory_space<vmem>>, vector<32x1xf32>
    %19 = vector.broadcast %18 : vector<32x1xf32> to vector<32x256xf32>
    %20 = arith.addf %17, %19 : vector<32x256xf32>
    %21 = vector.extract_strided_slice %20 {offsets = [0, 0], sizes = [16, 256], strides = [1, 1]} : vector<32x256xf32> to vector<16x256xf32>
    %22 = math.tanh %21 : vector<16x256xf32>
    %23 = vector.extract_strided_slice %20 {offsets = [16, 0], sizes = [16, 256], strides = [1, 1]} : vector<32x256xf32> to vector<16x256xf32>
    %24 = arith.negf %23 : vector<16x256xf32>
    %25 = math.exp %24 : vector<16x256xf32>
    %cst_18 = arith.constant 1.000000e+00 : f32
    %26 = vector.broadcast %cst_18 : f32 to vector<16x256xf32>
    %27 = arith.addf %26, %25 : vector<16x256xf32>
    %28 = arith.divf %26, %27 : vector<16x256xf32>
    %29 = arith.mulf %22, %28 : vector<16x256xf32>
    %c0_19 = arith.constant 0 : index
    %c0_20 = arith.constant 0 : index
    %30 = vector.load %arg5[%c0_19, %c0_20] : memref<16x16xbf16, #tpu.memory_space<vmem>>, vector<16x16xbf16>
    %31 = arith.truncf %29 : vector<16x256xf32> to vector<16x256xbf16>
    %cst_21 = arith.constant dense<0.000000e+00> : vector<16x256xf32>
    %32 = tpu.matmul %30, %31, %cst_21 {dimension_numbers = #tpu.dot_dimension_numbers<[1], [0], [0], [1], [0, 0, 1, 1], [], []>} : vector<16x16xbf16>, vector<16x256xbf16>, vector<16x256xf32> -> vector<16x256xf32>
    %c0_22 = arith.constant 0 : index
    %c0_23 = arith.constant 0 : index
    %33 = vector.load %arg6[%c0_22, %c0_23] : memref<16x1xf32, #tpu.memory_space<vmem>>, vector<16x1xf32>
    %34 = vector.broadcast %33 : vector<16x1xf32> to vector<16x256xf32>
    %35 = arith.addf %32, %34 : vector<16x256xf32>
    %c0_24 = arith.constant 0 : index
    %c0_25 = arith.constant 0 : index
    %c0_26 = arith.constant 0 : index
    %36 = vector.load %arg1[%c0_24, %c0_25, %c0_26] : memref<2x16x128xf32, #tpu.memory_space<vmem>>, vector<1x16x128xf32>
    %37 = vector.shape_cast %36 : vector<1x16x128xf32> to vector<16x128xf32>
    %38 = vector.extract_strided_slice %35 {offsets = [0, 0], sizes = [16, 128], strides = [1, 1]} : vector<16x256xf32> to vector<16x128xf32>
    %39 = arith.addf %37, %38 : vector<16x128xf32>
    %c0_27 = arith.constant 0 : index
    %c0_28 = arith.constant 0 : index
    %c0_29 = arith.constant 0 : index
    %40 = vector.load %arg7[%c0_27, %c0_28, %c0_29] : memref<2x16x128xf32, #tpu.memory_space<vmem>>, vector<1x16x128xf32>
    %41 = vector.shape_cast %40 : vector<1x16x128xf32> to vector<16x128xf32>
    %42 = vector.shape_cast %39 : vector<16x128xf32> to vector<1x16x128xf32>
    tpu.vector_store %arg7[%c0_27, %c0_28, %c0_29], %42 {strides = array<i32>} : memref<2x16x128xf32, #tpu.memory_space<vmem>>, vector<1x16x128xf32>,
    %c1_30 = arith.constant 1 : index
    %c0_31 = arith.constant 0 : index
    %c0_32 = arith.constant 0 : index
    %43 = vector.load %arg1[%c1_30, %c0_31, %c0_32] : memref<2x16x128xf32, #tpu.memory_space<vmem>>, vector<1x16x128xf32>
    %44 = vector.shape_cast %43 : vector<1x16x128xf32> to vector<16x128xf32>
    %45 = vector.extract_strided_slice %35 {offsets = [0, 128], sizes = [16, 128], strides = [1, 1]} : vector<16x256xf32> to vector<16x128xf32>
    %46 = arith.addf %44, %45 : vector<16x128xf32>
    %c1_33 = arith.constant 1 : index
    %c0_34 = arith.constant 0 : index
    %c0_35 = arith.constant 0 : index
    %47 = vector.load %arg7[%c1_33, %c0_34, %c0_35] : memref<2x16x128xf32, #tpu.memory_space<vmem>>, vector<1x16x128xf32>
    %48 = vector.shape_cast %47 : vector<1x16x128xf32> to vector<16x128xf32>
    %49 = vector.shape_cast %46 : vector<16x128xf32> to vector<1x16x128xf32>
    tpu.vector_store %arg7[%c1_33, %c0_34, %c0_35], %49 {strides = array<i32>} : memref<2x16x128xf32, #tpu.memory_space<vmem>>, vector<1x16x128xf32>,
    return
  }
  func.func @transform_0(%arg0: i32) -> (i32, i32, i32) {
    %c0_i32 = arith.constant 0 : i32
    %c0_i32_0 = arith.constant 0 : i32
    %c0_i32_1 = arith.constant 0 : i32
    return %arg0, %c0_i32, %c0_i32_0 : i32, i32, i32
  }
  func.func @transform_1(%arg0: i32) -> (i32, i32, i32) {
    %c0_i32 = arith.constant 0 : i32
    %c0_i32_0 = arith.constant 0 : i32
    %c0_i32_1 = arith.constant 0 : i32
    return %arg0, %c0_i32, %c0_i32_0 : i32, i32, i32
  }
  func.func @transform_2(%arg0: i32) -> (i32, i32) {
    %c0_i32 = arith.constant 0 : i32
    %c0_i32_0 = arith.constant 0 : i32
    %c0_i32_1 = arith.constant 0 : i32
    return %c0_i32, %c0_i32_0 : i32, i32
  }
  func.func @transform_3(%arg0: i32) -> (i32, i32) {
    %c0_i32 = arith.constant 0 : i32
    %c0_i32_0 = arith.constant 0 : i32
    %c0_i32_1 = arith.constant 0 : i32
    return %c0_i32, %c0_i32_0 : i32, i32
  }
  func.func @transform_4(%arg0: i32) -> (i32, i32) {
    %c0_i32 = arith.constant 0 : i32
    %c0_i32_0 = arith.constant 0 : i32
    %c0_i32_1 = arith.constant 0 : i32
    return %c0_i32, %c0_i32_0 : i32, i32
  }
  func.func @transform_5(%arg0: i32) -> (i32, i32) {
    %c0_i32 = arith.constant 0 : i32
    %c0_i32_0 = arith.constant 0 : i32
    %c0_i32_1 = arith.constant 0 : i32
    return %c0_i32, %c0_i32_0 : i32, i32
  }
  func.func @transform_6(%arg0: i32) -> (i32, i32, i32) {
    %c0_i32 = arith.constant 0 : i32
    %c0_i32_0 = arith.constant 0 : i32
    %c0_i32_1 = arith.constant 0 : i32
    return %arg0, %c0_i32, %c0_i32_0 : i32, i32, i32
  }
}

</mosaic_0001>

<llo_original>
// kernel: wave_block_forward.1
$region0: #{wave_block_forward.1}
  #allocation0 [shape = 'u32[]', space=smem, size = 0x4, offset = 0x4, fixed_abs, tag = 'smem constant byte address 0x4 - core index']
  #allocation1 [shape = 'u32[72,128]{1,0:T(1,128)}', space=vmem, size = 0x9000, scoped, tag = 'internal scratch']
  %s0 = inlined_call_operand.vmem [shape: f32[2,16,128], index: 0, kind: input, shape index: {}]
  %s1 = inlined_call_operand.vmem [shape: bf16[2,16,132], index: 1, kind: input, shape index: {}]
  %s2 = inlined_call_operand.vmem [shape: bf16[32,48], index: 2, kind: input, shape index: {}]
  %s3 = inlined_call_operand.vmem [shape: f32[32,1], index: 3, kind: input, shape index: {}]
  %s4 = inlined_call_operand.vmem [shape: bf16[16,16], index: 4, kind: input, shape index: {}]
  %s5 = inlined_call_operand.vmem [shape: f32[16,1], index: 5, kind: input, shape index: {}]
  %s6 = inlined_call_operand.hbm [shape: f32[2,16,128], index: 6, kind: output, shape index: {}]
  %s7 = sld [smem:[#allocation0]]
  $region34: #{wave_block_forward.1} parent=0
    _
  %s9 = ssub.s32 1, %s7
  %s10 = scalar_select 0, %s9, %s7
  $region1: #{wave_block_forward.1} parent=0
    #allocation2 [shape = 'u8[16384]{0}', space=vmem, size = 0x4000, scoped, tag = 'output window, operand 0, single buffered']
    #allocation3 [shape = 's32[1]{0}', space=sflag, size = 0x4, scoped, tag = 'scoped memory for wave_block_forward.1']
    %11 = vsyncpa [#allocation3], 0
    // Predicated region
    $region2: #{wave_block_forward.1} parent=1 // pred_check
      _
    $region3: #{wave_block_forward.1} parent=1 // pred_check_branch
      %13 = sbr.rel (0) target = $region5
    $region4: #{wave_block_forward.1} parent=1 // pred_region
      _
    $region5: #{wave_block_forward.1} parent=1 // pred_fallthru
      _
    // Predicated region
    $region6: #{wave_block_forward.1} parent=1 // pred_check
      _
    $region7: #{wave_block_forward.1} parent=1 // pred_check_branch
      %15 = sbr.rel (0) target = $region9
    $region8: #{wave_block_forward.1} parent=1 // pred_region
      _
    $region9: #{wave_block_forward.1} parent=1 // pred_fallthru
      _
    // Predicated region
    $region10: #{wave_block_forward.1} parent=1 // pred_check
      _
    $region11: #{wave_block_forward.1} parent=1 // pred_check_branch
      %17 = sbr.rel (0) target = $region13
    $region12: #{wave_block_forward.1} parent=1 // pred_region
      _
    $region13: #{wave_block_forward.1} parent=1 // pred_fallthru
      _
    // Predicated region
    $region14: #{wave_block_forward.1} parent=1 // pred_check
      _
    $region15: #{wave_block_forward.1} parent=1 // pred_check_branch
      %19 = sbr.rel (0) target = $region17
    $region16: #{wave_block_forward.1} parent=1 // pred_region
      _
    $region17: #{wave_block_forward.1} parent=1 // pred_fallthru
      _
    // Predicated region
    $region18: #{wave_block_forward.1} parent=1 // pred_check
      _
    $region19: #{wave_block_forward.1} parent=1 // pred_check_branch
      %21 = sbr.rel (0) target = $region21
    $region20: #{wave_block_forward.1} parent=1 // pred_region
      _
    $region21: #{wave_block_forward.1} parent=1 // pred_fallthru
      _
    // Predicated region
    $region22: #{wave_block_forward.1} parent=1 // pred_check
      _
    $region23: #{wave_block_forward.1} parent=1 // pred_check_branch
      %23 = sbr.rel (0) target = $region25
    $region24: #{wave_block_forward.1} parent=1 // pred_region
      _
    $region25: #{wave_block_forward.1} parent=1 // pred_fallthru
      _
    %v25 = vld [vmem:[%s1] sm:$0xf]
    %v26 = vld [vmem:[%s1 + $0x8] sm:$0xf]
    %s27 = scalar_lea.vmem %s1, 16
    %v28 = vld [vmem:[%s27] sm:$0xf]
    %v29 = vld [vmem:[%s27 + $0x8] sm:$0xf]
    %v32 = vunpack.c.l.b16 %v25
    %v33 = vunpack.c.l.b16 %v26
    %v34 = vpack.c.b16 %v33, %v32
    %v38 = vunpack.c.l.b16 %v28
    %v39 = vunpack.c.l.b16 %v29
    %v40 = vpack.c.b16 %v39, %v38
    %v42 = vld [vmem:[%s1] sm:$0xff]
    %v43 = vld [vmem:[%s1 + $0x8] sm:$0xff]
    %v44 = vld [vmem:[%s27] sm:$0xff]
    %v45 = vld [vmem:[%s27 + $0x8] sm:$0xff]
    %v48 = vunpack.c.l.b16 %v42
    %v49 = vunpack.c.h.b16 %v42
    %v50 = vunpack.c.l.b16 %v43
    %v51 = vunpack.c.h.b16 %v43
    %v52 = vpack.c.b16 %v50, %v48
    %v53 = vpack.c.b16 %v51, %v49
    %54 = vrot.lane.b32.xlu0 %v52, 126
    %v55 = vpop.permute.xlu0 %54
    %56 = vrot.lane.b32.xlu0 %v53, 126
    %v57 = vpop.permute.xlu0 %56
    %vm58 = vcmask 1031168
    %v59 = vsel %vm58, %v55, %v57
    %v63 = vunpack.c.l.b16 %v44
    %v64 = vunpack.c.h.b16 %v44
    %v65 = vunpack.c.l.b16 %v45
    %v66 = vunpack.c.h.b16 %v45
    %v67 = vpack.c.b16 %v65, %v63
    %v68 = vpack.c.b16 %v66, %v64
    %69 = vrot.lane.b32.xlu0 %v67, 126
    %v70 = vpop.permute.xlu0 %69
    %71 = vrot.lane.b32.xlu0 %v68, 126
    %v72 = vpop.permute.xlu0 %71
    %v73 = vsel %vm58, %v70, %v72
    %75 = vrot.lane.b32.xlu0 %v52, 124
    %v76 = vpop.permute.xlu0 %75
    %77 = vrot.lane.b32.xlu0 %v53, 124
    %v78 = vpop.permute.xlu0 %77
    %vm79 = vcmask 1014784
    %v80 = vsel %vm79, %v76, %v78
    %82 = vrot.lane.b32.xlu0 %v67, 124
    %v83 = vpop.permute.xlu0 %82
    %84 = vrot.lane.b32.xlu0 %v68, 124
    %v85 = vpop.permute.xlu0 %84
    %v86 = vsel %vm79, %v83, %v85
    %v88 = vld [vmem:[%s2] sm:$0xf]
    %v89 = vld [vmem:[%s2 + $0x4] sm:$0xf]
    %v90 = vld [vmem:[%s2 + $0x8] sm:$0xf]
    %v91 = vld [vmem:[%s2 + $0xc] sm:$0xf]
    %v92 = vld [vmem:[%s3] sm:$0xff]
    %v93 = vld [vmem:[%s3 + $0x8] sm:$0xff]
    %v94 = vld [vmem:[%s3 + $0x10] sm:$0xff]
    %v95 = vld [vmem:[%s3 + $0x18] sm:$0xff]
    %97 = vset.pattern.permute.xlu0 0
    %98 = vperm.xlu0 %97, %v92
    %v99 = vpop.permute.xlu0 %98
    %102 = vset.pattern.permute.xlu0 0
    %103 = vperm.xlu0 %102, %v93
    %v104 = vpop.permute.xlu0 %103
    %107 = vset.pattern.permute.xlu0 0
    %108 = vperm.xlu0 %107, %v94
    %v109 = vpop.permute.xlu0 %108
    %112 = vset.pattern.permute.xlu0 0
    %113 = vperm.xlu0 %112, %v95
    %v114 = vpop.permute.xlu0 %113
    %v120 = vunpack.c.l.b16 %v88
    %v121 = vunpack.c.l.b16 %v89
    %v122 = vunpack.c.l.b16 %v90
    %v123 = vunpack.c.l.b16 %v91
    %v124 = vpack.c.b16 %v121, %v120
    %v125 = vpack.c.b16 %v123, %v122
    %vm126 = vcmask 392192
    %v128 = vsel %vm126, %v124, 0
    %v131 = vsel %vm126, %v125, 0
    %133 = vmatpush.bf16.msra.mxu0 0
    %134 = vmatpush.bf16.msra.mxu0 0
    %135 = vmatpush.bf16.msra.mxu0 0
    %136 = vmatpush.bf16.msra.mxu0 0
    %137 = vmatpush.bf16.msra.mxu0 0
    %138 = vmatpush.bf16.msra.mxu0 %v80
    %139 = vmatpush.bf16.msra.mxu0 %v59
    %140 = vmatpush.bf16.msra.mxu0 %v34
    %141 = vmatmul.bf16.gmra.mxu0 %v128
    %v142 = vpop.f32.mrf.mxu0
    %v143 = vadd.f32 %v99, %v142
    %v144 = vpop.f32.mrf.mxu0
    %v145 = vadd.f32 %v104, %v144
    %146 = vmatmul.bf16.gmra.mxu0 %v131
    %v147 = vpop.f32.mrf.mxu0
    %v148 = vadd.f32 %v109, %v147
    %v149 = vpop.f32.mrf.mxu0
    %v150 = vadd.f32 %v114, %v149
    %151 = vdwg.mxu0
    %152 = vmatpush.bf16.msra.mxu0 0
    %153 = vmatpush.bf16.msra.mxu0 0
    %154 = vmatpush.bf16.msra.mxu0 0
    %155 = vmatpush.bf16.msra.mxu0 0
    %156 = vmatpush.bf16.msra.mxu0 0
    %157 = vmatpush.bf16.msra.mxu0 %v86
    %158 = vmatpush.bf16.msra.mxu0 %v73
    %159 = vmatpush.bf16.msra.mxu0 %v40
    %160 = vmatmul.bf16.gmra.mxu0 %v128
    %v161 = vpop.f32.mrf.mxu0
    %v162 = vadd.f32 %v99, %v161
    %v163 = vpop.f32.mrf.mxu0
    %v164 = vadd.f32 %v104, %v163
    %165 = vmatmul.bf16.gmra.mxu0 %v131
    %v166 = vpop.f32.mrf.mxu0
    %v167 = vadd.f32 %v109, %v166
    %v168 = vpop.f32.mrf.mxu0
    %v169 = vadd.f32 %v114, %v168
    %170 = vdwg.mxu0
    %v171 = vtanh.pop %v143
    %v172 = vtanh.pop %v162
    %v173 = vtanh.pop %v145
    %v174 = vtanh.pop %v164
    %v175 = vxor.u32 %v148, 2147483648
    %v176 = vxor.u32 %v167, 2147483648
    %v177 = vxor.u32 %v150, 2147483648
    %v178 = vxor.u32 %v169, 2147483648
    %v179 = vmul.f32 %v175, 1.442695
    %v180 = vpow.pop %v179
    %v181 = vmul.f32 %v176, 1.442695
    %v182 = vpow.pop %v181
    %v183 = vmul.f32 %v177, 1.442695
    %v184 = vpow.pop %v183
    %v185 = vmul.f32 %v178, 1.442695
    %v186 = vpow.pop %v185
    %v187 = vadd.f32 %v180, 1.0
    %v188 = vadd.f32 %v182, 1.0
    %v189 = vadd.f32 %v184, 1.0
    %v190 = vadd.f32 %v186, 1.0
    %v191 = vrcp.pop %v187
    %v192 = vmul.f32 %v187, %v191
    %v193 = vsub.f32 1.0, %v192
    %v194 = vmul.f32 %v191, %v193
    %v195 = vadd.f32 %v191, %v194
    %vm196 = vweird.f32 %v187
    %vm197 = vweird.f32 %v191
    %vm198 = vmor %vm196, %vm197
    %v199 = vsel %vm198, %v191, %v195
    %v200 = vand.u32 2147483647, %v187
    %vm201 = vcmp.eq.f32.partialorder %v200, 8.507059e+37
    %v202 = vand.u32 %v187, 2147483648
    %v203 = vor.u32 1.1754944e-38, %v202
    %v204 = vsel %vm201, %v203, %v199
    %v205 = vmul.f32 1.0, %v204
    %v206 = vrcp.pop %v188
    %v207 = vmul.f32 %v188, %v206
    %v208 = vsub.f32 1.0, %v207
    %v209 = vmul.f32 %v206, %v208
    %v210 = vadd.f32 %v206, %v209
    %vm211 = vweird.f32 %v188
    %vm212 = vweird.f32 %v206
    %vm213 = vmor %vm211, %vm212
    %v214 = vsel %vm213, %v206, %v210
    %v215 = vand.u32 2147483647, %v188
    %vm216 = vcmp.eq.f32.partialorder %v215, 8.507059e+37
    %v217 = vand.u32 %v188, 2147483648
    %v218 = vor.u32 1.1754944e-38, %v217
    %v219 = vsel %vm216, %v218, %v214
    %v220 = vmul.f32 1.0, %v219
    %v221 = vrcp.pop %v189
    %v222 = vmul.f32 %v189, %v221
    %v223 = vsub.f32 1.0, %v222
    %v224 = vmul.f32 %v221, %v223
    %v225 = vadd.f32 %v221, %v224
    %vm226 = vweird.f32 %v189
    %vm227 = vweird.f32 %v221
    %vm228 = vmor %vm226, %vm227
    %v229 = vsel %vm228, %v221, %v225
    %v230 = vand.u32 2147483647, %v189
    %vm231 = vcmp.eq.f32.partialorder %v230, 8.507059e+37
    %v232 = vand.u32 %v189, 2147483648
    %v233 = vor.u32 1.1754944e-38, %v232
    %v234 = vsel %vm231, %v233, %v229
    %v235 = vmul.f32 1.0, %v234
    %v236 = vrcp.pop %v190
    %v237 = vmul.f32 %v190, %v236
    %v238 = vsub.f32 1.0, %v237
    %v239 = vmul.f32 %v236, %v238
    %v240 = vadd.f32 %v236, %v239
    %vm241 = vweird.f32 %v190
    %vm242 = vweird.f32 %v236
    %vm243 = vmor %vm241, %vm242
    %v244 = vsel %vm243, %v236, %v240
    %v245 = vand.u32 2147483647, %v190
    %vm246 = vcmp.eq.f32.partialorder %v245, 8.507059e+37
    %v247 = vand.u32 %v190, 2147483648
    %v248 = vor.u32 1.1754944e-38, %v247
    %v249 = vsel %vm246, %v248, %v244
    %v250 = vmul.f32 1.0, %v249
    %v251 = vmul.f32 %v171, %v205
    %v252 = vmul.f32 %v172, %v220
    %v253 = vmul.f32 %v173, %v235
    %v254 = vmul.f32 %v174, %v250
    %v255 = vld [vmem:[%s4] sm:$0xf]
    %v256 = vld [vmem:[%s4 + $0x4] sm:$0xf]
    %v257 = vpack.c.bf16 %v253, %v251
    %v258 = vpack.c.bf16 %v254, %v252
    %v259 = vld [vmem:[%s5] sm:$0xff]
    %v260 = vld [vmem:[%s5 + $0x8] sm:$0xff]
    %262 = vset.pattern.permute.xlu0 0
    %263 = vperm.xlu0 %262, %v259
    %v264 = vpop.permute.xlu0 %263
    %267 = vset.pattern.permute.xlu0 0
    %268 = vperm.xlu0 %267, %v260
    %v269 = vpop.permute.xlu0 %268
    %v273 = vunpack.c.l.b16 %v255
    %v274 = vunpack.c.l.b16 %v256
    %v275 = vpack.c.b16 %v274, %v273
    %vm276 = vcmask 130048
    %v278 = vsel %vm276, %v275, 0
    %280 = vmatpush.bf16.msra.mxu0 0
    %281 = vmatpush.bf16.msra.mxu0 0
    %282 = vmatpush.bf16.msra.mxu0 0
    %283 = vmatpush.bf16.msra.mxu0 0
    %284 = vmatpush.bf16.msra.mxu0 0
    %285 = vmatpush.bf16.msra.mxu0 0
    %286 = vmatpush.bf16.msra.mxu0 0
    %287 = vmatpush.bf16.msra.mxu0 %v257
    %288 = vmatmul.bf16.gmra.mxu0 %v278
    %v289 = vpop.f32.mrf.mxu0
    %v290 = vadd.f32 %v264, %v289
    %v291 = vpop.f32.mrf.mxu0
    %v292 = vadd.f32 %v269, %v291
    %293 = vdwg.mxu0
    %294 = vmatpush.bf16.msra.mxu0 0
    %295 = vmatpush.bf16.msra.mxu0 0
    %296 = vmatpush.bf16.msra.mxu0 0
    %297 = vmatpush.bf16.msra.mxu0 0
    %298 = vmatpush.bf16.msra.mxu0 0
    %299 = vmatpush.bf16.msra.mxu0 0
    %300 = vmatpush.bf16.msra.mxu0 0
    %301 = vmatpush.bf16.msra.mxu0 %v258
    %302 = vmatmul.bf16.gmra.mxu0 %v278
    %v303 = vpop.f32.mrf.mxu0
    %v304 = vadd.f32 %v264, %v303
    %v305 = vpop.f32.mrf.mxu0
    %v306 = vadd.f32 %v269, %v305
    %307 = vdwg.mxu0
    %v308 = vld [vmem:[%s0] sm:$0xff]
    %v309 = vld [vmem:[%s0 + $0x8] sm:$0xff]
    %v310 = vadd.f32 %v308, %v290
    %v311 = vadd.f32 %v309, %v292
    %312 = vst [vmem:[#allocation2] sm:$0xff] %v310
    %313 = vst [vmem:[#allocation2 + $0x8] sm:$0xff] %v311
    %s314 = scalar_lea.vmem %s0, 16
    %v315 = vld [vmem:[%s314] sm:$0xff]
    %v316 = vld [vmem:[%s314 + $0x8] sm:$0xff]
    %v317 = vadd.f32 %v315, %v304
    %v318 = vadd.f32 %v316, %v306
    %s319 = scalar_lea.vmem [#allocation2], 16
    %320 = vst [vmem:[%s319] sm:$0xff] %v317
    %321 = vst [vmem:[%s319 + $0x8] sm:$0xff] %v318
    // Predicated region
    $region26: #{wave_block_forward.1} parent=1 // pred_check
      _
    $region27: #{wave_block_forward.1} parent=1 // pred_check_branch
      %323 = sbr.rel (0) target = $region29
    $region28: #{wave_block_forward.1} parent=1 // pred_region
      %325 = vsyncadd [#allocation3], 0
      %s326 = sshll.u32 [#allocation2], 4
      %s327 = int_to_ptr.vmem [resolvable:$true] %s326
      %s328 = sshll.u32 %s6, 4
      %s329 = int_to_ptr.hbm [resolvable:$true] %s328
      %334 = dma.vmem_to_hbm [thread:$0]  %s327, 512, %s329, [#allocation3], 128, 128, 8
    $region29: #{wave_block_forward.1} parent=1 // pred_fallthru
      _
    // Predicated region
    $region30: #{wave_block_forward.1} parent=1 // pred_check
      _
    $region31: #{wave_block_forward.1} parent=1 // pred_check_branch
      %336 = sbr.rel (0) target = $region33
    $region32: #{wave_block_forward.1} parent=1 // pred_region
      %338 = dma.done [#allocation3], 512
    $region33: #{wave_block_forward.1} parent=1 // pred_fallthru
      _
    %339 = vsyncpa [#allocation3], 1

</llo_original>
